<compile_context>
chip_gen: v6e
topology: v6e:2x2x1
jax: 0.10.0
libtpu: 0.0.40
codegen_flags: <defaults>
</compile_context>

<pallas_src>
import math
from functools import partial

import jax
import jax.numpy as jnp
import numpy as np
from jax.experimental import pallas as pl
from jax.experimental.pallas import tpu as pltpu


# --------------------------------- in-kernel helpers ---------------------------------

def _layer_norm(x, gamma, beta, eps):
    # torch.nn.LayerNorm over the last dim (biased variance), f32 statistics.
    mu = jnp.mean(x, axis=-1, keepdims=True)
    xc = x - mu
    var = jnp.mean(xc * xc, axis=-1, keepdims=True)
    return xc * jax.lax.rsqrt(var + eps) * gamma + beta


# ----------------------------------- the kernel --------------------------------------

def residual_block_a_kernel(
    x_ref, pc_ref, pch_ref, w1_ref, w2_ref, w3_ref, out_ref,
    *, seq_len, kernel_size, dilation, eps, fuse_taps,
):
    Bt, S, C = x_ref.shape
    assert S == seq_len
    Ch = w1_ref.shape[1]                      # half_channel
    M = Bt * S
    K = kernel_size

    # Packed parameters (constant-index BlockSpecs -> VMEM-resident across the grid).
    g1, b1, c3b = pc_ref[0:1, :], pc_ref[1:2, :], pc_ref[2:3, :]
    g2, b2 = pch_ref[0:1, :], pch_ref[1:2, :]
    g3, b3 = pch_ref[2:3, :], pch_ref[3:4, :]
    c1b, c2b = pch_ref[4:5, :], pch_ref[5:6, :]

    x = x_ref[...].astype(jnp.float32).reshape(M, C)      # (M, C) f32

    # --- ln1 + relu + conv1 (1x1, C -> C/2): bf16 operands, f32 accumulate ---
    h = jnp.maximum(_layer_norm(x, g1, b1, eps), 0.0)
    h1 = jnp.dot(h.astype(jnp.bfloat16), w1_ref[...],
                 preferred_element_type=jnp.float32) + c1b

    # --- ln2 + relu ---
    h2 = jnp.maximum(_layer_norm(h1, g2, b2, eps), 0.0)

    # --- causal dilated conv2 ((1, K), C/2 -> C/2) via shifted matmuls ---
    # Row index within each sequence; rows with row_in_seq < shift correspond to the causal
    # left zero-pad (and also kill any roll wrap-around across batch boundaries).
    row_in_seq = jax.lax.broadcasted_iota(jnp.int32, (Bt, S, Ch), 1).reshape(M, Ch)

    def shifted_tap(shift):
        if shift == 0:
            return h2
        if shift >= S:
            return jnp.zeros_like(h2)                      # tap entirely off the left edge
        rolled = pltpu.roll(h2, shift=shift, axis=0)       # XLU sublane rotate (no zero slab)
        return jnp.where(row_in_seq >= shift, rolled, 0.0)

    if fuse_taps:
        # Deep-contraction path (Ch % 128 == 0): one (M, K*Ch) @ (K*Ch, Ch) matmul.
        lhs = jnp.concatenate(
            [shifted_tap((K - 1 - j) * dilation).astype(jnp.bfloat16) for j in range(K)],
            axis=-1)
        w2f = w2_ref[...].reshape(K * Ch, Ch)
        acc = jnp.dot(lhs, w2f, preferred_element_type=jnp.float32) + c2b
    else:
        acc = None
        for j in range(K):                                 # static unroll over conv taps
            shift = (K - 1 - j) * dilation
            if shift >= S:
                continue
            contrib = jnp.dot(shifted_tap(shift).astype(jnp.bfloat16), w2_ref[j],
                              preferred_element_type=jnp.float32)
            acc = contrib if acc is None else acc + contrib
        acc = acc + c2b                                    # bias added once

    # --- ln3 + relu + conv3 (1x1, C/2 -> C) + residual ---
    h3 = jnp.maximum(_layer_norm(acc, g3, b3, eps), 0.0)
    out = jnp.dot(h3.astype(jnp.bfloat16), w3_ref[...],
                  preferred_element_type=jnp.float32) + c3b

    out_ref[...] = (out + x).reshape(Bt, S, C).astype(out_ref.dtype)


# ------------------------------------ wrapper -----------------------------------------

_PACK_C = ("g1", "b1", "c3b")                       # (3, C)  f32
_PACK_CH = ("g2", "b2", "g3", "b3", "c1b", "c2b")   # (6, Ch) f32


def _step_vmem_bytes(bt, S, C, Ch, K):
    rows = bt * S
    io = 2 * 2 * rows * C * 4                       # double-buffered x + out blocks (f32)
    act = rows * (3 * C + (6 + 2 * K) * Ch) * 4     # live f32/bf16 intermediates (generous)
    wts = 2 * 2 * (C * Ch + K * Ch * Ch + Ch * C)   # double-buffered bf16 weights
    par = 2 * (3 * C + 6 * Ch) * 4                  # packed LN params / biases
    return io + act + wts + par + (2 << 20)         # + slack for (8,128) tile padding


def _pick_batch_tile(B, S, C, Ch, K, budget_bytes, max_rows=2048):
    bt = 1
    for cand in range(1, B + 1):
        if B % cand:
            continue
        if cand * S > max_rows:
            break
        if _step_vmem_bytes(cand, S, C, Ch, K) > budget_bytes:
            break
        bt = cand
    return bt


def residual_block_a(x, params, *, kernel_size, dilation, eps=1e-8):
    B, S, C = x.shape
    Ch = params["w1"].shape[1]
    K = kernel_size

    # Keep the per-step footprint comfortably under v7x's scoped VMEM; only raise the limit
    # (up to ~100 MiB, for v5e/v6e's 128 MiB) when the chosen batch tile actually needs it.
    # TODO(synk): for very long sequences add an S grid axis with a (K-1)*dilation causal halo.
    bt = _pick_batch_tile(B, S, C, Ch, K, budget_bytes=40 * 2**20)
    step_bytes = _step_vmem_bytes(bt, S, C, Ch, K)
    vmem_limit = int(min(100 * 2**20, max(32 * 2**20, 2 * step_bytes)))

    fuse_taps = (K > 1) and (Ch % 128 == 0)   # deepen conv2 contraction on wide channels

    p_c = jnp.concatenate([params[k] for k in _PACK_C], axis=0).astype(jnp.float32)
    p_ch = jnp.concatenate([params[k] for k in _PACK_CH], axis=0).astype(jnp.float32)

    def const_spec(shape):
        # Constant block index -> weights / LN params stay VMEM-resident across grid steps.
        ndim = len(shape)
        return pl.BlockSpec(shape, lambda b, _n=ndim: (0,) * _n)

    in_specs = [
        pl.BlockSpec((bt, S, C), lambda b: (b, 0, 0)),   # x
        const_spec((3, C)),                              # g1, b1, conv3 bias
        const_spec((6, Ch)),                             # g2, b2, g3, b3, conv1 bias, conv2 bias
        const_spec((C, Ch)),                             # conv1 W.T (bf16)
        const_spec((K, Ch, Ch)),                         # conv2 per-tap W.T (bf16)
        const_spec((Ch, C)),                             # conv3 W.T (bf16)
    ]

    flops = 2 * B * S * (C * Ch + K * Ch * Ch + Ch * C)
    bytes_accessed = (2 * B * S * C * 4                          # x in + out (f32)
                      + 2 * (C * Ch + K * Ch * Ch + Ch * C)      # bf16 weights
                      + 4 * (3 * C + 6 * Ch))                    # packed f32 params

    kernel = partial(residual_block_a_kernel, seq_len=S, kernel_size=K,
                     dilation=dilation, eps=eps, fuse_taps=fuse_taps)
    return pl.pallas_call(
        kernel,
        out_shape=jax.ShapeDtypeStruct((B, S, C), x.dtype),
        grid=(B // bt,),
        in_specs=in_specs,
        out_specs=pl.BlockSpec((bt, S, C), lambda b: (b, 0, 0)),
        compiler_params=pltpu.CompilerParams(
            dimension_semantics=("parallel",),
            vmem_limit_bytes=vmem_limit),
        cost_estimate=pl.CostEstimate(flops=flops,
                                      transcendentals=3 * B * S,
                                      bytes_accessed=bytes_accessed),
    )(x, p_c, p_ch, params["w1"], params["w2"], params["w3"])


# ------------------------------- deterministic init -----------------------------------

def init_params(key, in_channel, out_channel, kernel_size):
    half = out_channel // 2

    def conv_params(k, fan_in, w_shape, bias_n):
        # nn.Conv2d default init: U(-1/sqrt(fan_in), 1/sqrt(fan_in)); weights stored as W.T, bf16.
        bound = 1.0 / math.sqrt(fan_in)
        kw, kb = jax.random.split(k)
        w = jax.random.uniform(kw, w_shape, jnp.float32, -bound, bound)
        b = jax.random.uniform(kb, (1, bias_n), jnp.float32, -bound, bound)
        return w.astype(jnp.bfloat16), b

    k1, k2, k3 = jax.random.split(key, 3)
    w1, c1b = conv_params(k1, in_channel, (in_channel, half), half)                 # conv1
    w2, c2b = conv_params(k2, half * kernel_size, (kernel_size, half, half), half)  # conv2 taps
    w3, c3b = conv_params(k3, half, (half, out_channel), out_channel)               # conv3
    return {
        "g1": jnp.ones((1, out_channel), jnp.float32),
        "b1": jnp.zeros((1, out_channel), jnp.float32),
        "w1": w1, "c1b": c1b,
        "g2": jnp.ones((1, half), jnp.float32),
        "b2": jnp.zeros((1, half), jnp.float32),
        "w2": w2, "c2b": c2b,
        "g3": jnp.ones((1, half), jnp.float32),
        "b3": jnp.zeros((1, half), jnp.float32),
        "w3": w3, "c3b": c3b,
    }


# --------------------- pure-JAX reference (bf16 matmuls, f32 math) ---------------------

def residual_block_a_ref(x, p, *, kernel_size, dilation, eps=1e-8):
    def ln(v, g, b):
        mu = v.mean(-1, keepdims=True)
        var = ((v - mu) ** 2).mean(-1, keepdims=True)
        return (v - mu) * jax.lax.rsqrt(var + eps) * g + b

    def mm(a, w):   # mirrors the kernel: bf16 operands, f32 accumulation
        return jnp.dot(a.astype(jnp.bfloat16), w, preferred_element_type=jnp.float32)

    B, S, C = x.shape
    h = jax.nn.relu(ln(x.astype(jnp.float32), p["g1"], p["b1"]))
    h1 = mm(h, p["w1"]) + p["c1b"]
    h2 = jax.nn.relu(ln(h1, p["g2"], p["b2"]))
    acc = None
    for j in range(kernel_size):
        shift = (kernel_size - 1 - j) * dilation
        if shift >= S:
            continue
        tap = jnp.pad(h2[:, :S - shift, :], ((0, 0), (shift, 0), (0, 0)))
        y = mm(tap, p["w2"][j])
        acc = y if acc is None else acc + y
    h2c = acc + p["c2b"]
    h3 = jax.nn.relu(ln(h2c, p["g3"], p["b3"]))
    return mm(h3, p["w3"]) + p["c3b"] + x


# --------------------------------------- main ------------------------------------------

if __name__ == "__main__":
    B, S = 2, 8                         # batch, sequence length
    in_channel = out_channel = 32       # residual block requires in_channel == out_channel
    kernel_size, dilation = 3, 2
    eps = 1e-8                          # matches nn.LayerNorm(eps=1e-08) in the module

    key = jax.random.PRNGKey(0)
    kx, kp = jax.random.split(key)
    x = jax.random.normal(kx, (B, S, out_channel), jnp.float32)
    params = init_params(kp, in_channel, out_channel, kernel_size)

    out = residual_block_a(x, params, kernel_size=kernel_size, dilation=dilation, eps=eps)
    jax.block_until_ready(out)
    assert out.shape == (B, S, out_channel)

    ref = residual_block_a_ref(x, params, kernel_size=kernel_size, dilation=dilation, eps=eps)
    # Reference emulates the kernel's bf16-operand matmuls, so the tolerance can be tight.
    np.testing.assert_allclose(np.asarray(out), np.asarray(ref), rtol=2e-3, atol=2e-3)

    print("KERNEL_OK")
</pallas_src>

<mosaic_0001>
module attributes {stable_mosaic.version = 11 : i64} {
  func.func @residual_block_a_kernel(%arg0: i32, %arg1: memref<2x8x32xf32, #tpu.memory_space<vmem>>, %arg2: memref<3x32xf32, #tpu.memory_space<vmem>>, %arg3: memref<6x16xf32, #tpu.memory_space<vmem>>, %arg4: memref<32x16xbf16, #tpu.memory_space<vmem>>, %arg5: memref<3x16x16xbf16, #tpu.memory_space<vmem>>, %arg6: memref<16x32xbf16, #tpu.memory_space<vmem>>, %arg7: memref<2x8x32xf32, #tpu.memory_space<vmem>>) attributes {dimension_semantics = [#tpu.dimension_semantics<parallel>], iteration_bounds = array<i64: 1>, scalar_prefetch = 0 : i64, scratch_operands = 0 : i64, tpu.core_type = #tpu.core_type<tc>, window_params = [{transform_indices = @transform_0, window_bounds = array<i64: 2, 8, 32>}, {pipeline_mode = #tpu.pipeline_mode<synchronous>, transform_indices = @transform_1, window_bounds = array<i64: 3, 32>}, {pipeline_mode = #tpu.pipeline_mode<synchronous>, transform_indices = @transform_2, window_bounds = array<i64: 6, 16>}, {pipeline_mode = #tpu.pipeline_mode<synchronous>, transform_indices = @transform_3, window_bounds = array<i64: 32, 16>}, {pipeline_mode = #tpu.pipeline_mode<synchronous>, transform_indices = @transform_4, window_bounds = array<i64: 3, 16, 16>}, {pipeline_mode = #tpu.pipeline_mode<synchronous>, transform_indices = @transform_5, window_bounds = array<i64: 16, 32>}, {transform_indices = @transform_6, window_bounds = array<i64: 2, 8, 32>}]} {
    %c0 = arith.constant 0 : index
    %c0_0 = arith.constant 0 : index
    %0 = vector.load %arg2[%c0, %c0_0] : memref<3x32xf32, #tpu.memory_space<vmem>>, vector<1x32xf32>
    %c1 = arith.constant 1 : index
    %c0_1 = arith.constant 0 : index
    %1 = vector.load %arg2[%c1, %c0_1] : memref<3x32xf32, #tpu.memory_space<vmem>>, vector<1x32xf32>
    %c2 = arith.constant 2 : index
    %c0_2 = arith.constant 0 : index
    %2 = vector.load %arg2[%c2, %c0_2] : memref<3x32xf32, #tpu.memory_space<vmem>>, vector<1x32xf32>
    %c0_3 = arith.constant 0 : index
    %c0_4 = arith.constant 0 : index
    %3 = vector.load %arg3[%c0_3, %c0_4] : memref<6x16xf32, #tpu.memory_space<vmem>>, vector<1x16xf32>
    %c1_5 = arith.constant 1 : index
    %c0_6 = arith.constant 0 : index
    %4 = vector.load %arg3[%c1_5, %c0_6] : memref<6x16xf32, #tpu.memory_space<vmem>>, vector<1x16xf32>
    %c2_7 = arith.constant 2 : index
    %c0_8 = arith.constant 0 : index
    %5 = vector.load %arg3[%c2_7, %c0_8] : memref<6x16xf32, #tpu.memory_space<vmem>>, vector<1x16xf32>
    %c3 = arith.constant 3 : index
    %c0_9 = arith.constant 0 : index
    %6 = vector.load %arg3[%c3, %c0_9] : memref<6x16xf32, #tpu.memory_space<vmem>>, vector<1x16xf32>
    %c4 = arith.constant 4 : index
    %c0_10 = arith.constant 0 : index
    %7 = vector.load %arg3[%c4, %c0_10] : memref<6x16xf32, #tpu.memory_space<vmem>>, vector<1x16xf32>
    %c5 = arith.constant 5 : index
    %c0_11 = arith.constant 0 : index
    %8 = vector.load %arg3[%c5, %c0_11] : memref<6x16xf32, #tpu.memory_space<vmem>>, vector<1x16xf32>
    %c0_12 = arith.constant 0 : index
    %c0_13 = arith.constant 0 : index
    %c0_14 = arith.constant 0 : index
    %9 = vector.load %arg1[%c0_12, %c0_13, %c0_14] : memref<2x8x32xf32, #tpu.memory_space<vmem>>, vector<2x8x32xf32>
    %10 = vector.shape_cast %9 : vector<2x8x32xf32> to vector<16x32xf32>
    %cst = arith.constant dense<0.000000e+00> : vector<16xf32>
    %11 = vector.multi_reduction <add>, %10, %cst [1] : vector<16x32xf32> to vector<16xf32>
    %12 = vector.shape_cast %11 : vector<16xf32> to vector<16x1xf32>
    %cst_15 = arith.constant 3.200000e+01 : f32
    %13 = vector.broadcast %cst_15 : f32 to vector<16x1xf32>
    %14 = arith.divf %12, %13 : vector<16x1xf32>
    %15 = vector.broadcast %14 : vector<16x1xf32> to vector<16x32xf32>
    %16 = arith.subf %10, %15 : vector<16x32xf32>
    %17 = arith.mulf %16, %16 : vector<16x32xf32>
    %cst_16 = arith.constant dense<0.000000e+00> : vector<16xf32>
    %18 = vector.multi_reduction <add>, %17, %cst_16 [1] : vector<16x32xf32> to vector<16xf32>
    %19 = vector.shape_cast %18 : vector<16xf32> to vector<16x1xf32>
    %cst_17 = arith.constant 3.200000e+01 : f32
    %20 = vector.broadcast %cst_17 : f32 to vector<16x1xf32>
    %21 = arith.divf %19, %20 : vector<16x1xf32>
    %cst_18 = arith.constant 9.99999993E-9 : f32
    %22 = vector.broadcast %cst_18 : f32 to vector<16x1xf32>
    %23 = arith.addf %21, %22 : vector<16x1xf32>
    %24 = math.rsqrt %23 : vector<16x1xf32>
    %25 = vector.broadcast %24 : vector<16x1xf32> to vector<16x32xf32>
    %26 = arith.mulf %16, %25 : vector<16x32xf32>
    %27 = vector.broadcast %0 : vector<1x32xf32> to vector<16x32xf32>
    %28 = arith.mulf %26, %27 : vector<16x32xf32>
    %29 = vector.broadcast %1 : vector<1x32xf32> to vector<16x32xf32>
    %30 = arith.addf %28, %29 : vector<16x32xf32>
    %cst_19 = arith.constant 0.000000e+00 : f32
    %31 = vector.broadcast %cst_19 : f32 to vector<16x32xf32>
    %32 = arith.maximumf %30, %31 : vector<16x32xf32>
    %33 = arith.truncf %32 : vector<16x32xf32> to vector<16x32xbf16>
    %c0_20 = arith.constant 0 : index
    %c0_21 = arith.constant 0 : index
    %34 = vector.load %arg4[%c0_20, %c0_21] : memref<32x16xbf16, #tpu.memory_space<vmem>>, vector<32x16xbf16>
    %cst_22 = arith.constant dense<0.000000e+00> : vector<16x16xf32>
    %35 = tpu.matmul %33, %34, %cst_22 {dimension_numbers = #tpu.dot_dimension_numbers<[1], [0], [0], [1], [0, 0, 1, 1], [], []>} : vector<16x32xbf16>, vector<32x16xbf16>, vector<16x16xf32> -> vector<16x16xf32>
    %36 = vector.broadcast %7 : vector<1x16xf32> to vector<16x16xf32>
    %37 = arith.addf %35, %36 : vector<16x16xf32>
    %cst_23 = arith.constant dense<0.000000e+00> : vector<16xf32>
    %38 = vector.multi_reduction <add>, %37, %cst_23 [1] : vector<16x16xf32> to vector<16xf32>
    %39 = vector.shape_cast %38 : vector<16xf32> to vector<16x1xf32>
    %cst_24 = arith.constant 1.600000e+01 : f32
    %40 = vector.broadcast %cst_24 : f32 to vector<16x1xf32>
    %41 = arith.divf %39, %40 : vector<16x1xf32>
    %42 = vector.broadcast %41 : vector<16x1xf32> to vector<16x16xf32>
    %43 = arith.subf %37, %42 : vector<16x16xf32>
    %44 = arith.mulf %43, %43 : vector<16x16xf32>
    %cst_25 = arith.constant dense<0.000000e+00> : vector<16xf32>
    %45 = vector.multi_reduction <add>, %44, %cst_25 [1] : vector<16x16xf32> to vector<16xf32>
    %46 = vector.shape_cast %45 : vector<16xf32> to vector<16x1xf32>
    %cst_26 = arith.constant 1.600000e+01 : f32
    %47 = vector.broadcast %cst_26 : f32 to vector<16x1xf32>
    %48 = arith.divf %46, %47 : vector<16x1xf32>
    %cst_27 = arith.constant 9.99999993E-9 : f32
    %49 = vector.broadcast %cst_27 : f32 to vector<16x1xf32>
    %50 = arith.addf %48, %49 : vector<16x1xf32>
    %51 = math.rsqrt %50 : vector<16x1xf32>
    %52 = vector.broadcast %51 : vector<16x1xf32> to vector<16x16xf32>
    %53 = arith.mulf %43, %52 : vector<16x16xf32>
    %54 = vector.broadcast %3 : vector<1x16xf32> to vector<16x16xf32>
    %55 = arith.mulf %53, %54 : vector<16x16xf32>
    %56 = vector.broadcast %4 : vector<1x16xf32> to vector<16x16xf32>
    %57 = arith.addf %55, %56 : vector<16x16xf32>
    %cst_28 = arith.constant 0.000000e+00 : f32
    %58 = vector.broadcast %cst_28 : f32 to vector<16x16xf32>
    %59 = arith.maximumf %57, %58 : vector<16x16xf32>
    %60 = tpu.iota {dimensions = array<i32: 1>} : vector<2x8x16xi32>
    %61 = vector.shape_cast %60 : vector<2x8x16xi32> to vector<16x16xi32>
    %c4_i32 = arith.constant 4 : i32
    %62 = tpu.dynamic_rotate %59 by %c4_i32 dim 0 : vector<16x16xf32>, i32 -> vector<16x16xf32>
    %c4_i32_29 = arith.constant 4 : i32
    %63 = vector.broadcast %c4_i32_29 : i32 to vector<16x16xi32>
    %64 = arith.cmpi sge, %61, %63 : vector<16x16xi32>
    %cst_30 = arith.constant 0.000000e+00 : f32
    %65 = vector.broadcast %cst_30 : f32 to vector<16x16xf32>
    %66 = arith.select %64, %62, %65 : vector<16x16xi1>, vector<16x16xf32>
    %67 = arith.truncf %66 : vector<16x16xf32> to vector<16x16xbf16>
    %c0_31 = arith.constant 0 : index
    %c0_32 = arith.constant 0 : index
    %c0_33 = arith.constant 0 : index
    %68 = vector.load %arg5[%c0_31, %c0_32, %c0_33] : memref<3x16x16xbf16, #tpu.memory_space<vmem>>, vector<1x16x16xbf16>
    %69 = vector.shape_cast %68 : vector<1x16x16xbf16> to vector<16x16xbf16>
    %cst_34 = arith.constant dense<0.000000e+00> : vector<16x16xf32>
    %70 = tpu.matmul %67, %69, %cst_34 {dimension_numbers = #tpu.dot_dimension_numbers<[1], [0], [0], [1], [0, 0, 1, 1], [], []>} : vector<16x16xbf16>, vector<16x16xbf16>, vector<16x16xf32> -> vector<16x16xf32>
    %c2_i32 = arith.constant 2 : i32
    %71 = tpu.dynamic_rotate %59 by %c2_i32 dim 0 : vector<16x16xf32>, i32 -> vector<16x16xf32>
    %c2_i32_35 = arith.constant 2 : i32
    %72 = vector.broadcast %c2_i32_35 : i32 to vector<16x16xi32>
    %73 = arith.cmpi sge, %61, %72 : vector<16x16xi32>
    %cst_36 = arith.constant 0.000000e+00 : f32
    %74 = vector.broadcast %cst_36 : f32 to vector<16x16xf32>
    %75 = arith.select %73, %71, %74 : vector<16x16xi1>, vector<16x16xf32>
    %76 = arith.truncf %75 : vector<16x16xf32> to vector<16x16xbf16>
    %c1_37 = arith.constant 1 : index
    %c0_38 = arith.constant 0 : index
    %c0_39 = arith.constant 0 : index
    %77 = vector.load %arg5[%c1_37, %c0_38, %c0_39] : memref<3x16x16xbf16, #tpu.memory_space<vmem>>, vector<1x16x16xbf16>
    %78 = vector.shape_cast %77 : vector<1x16x16xbf16> to vector<16x16xbf16>
    %cst_40 = arith.constant dense<0.000000e+00> : vector<16x16xf32>
    %79 = tpu.matmul %76, %78, %cst_40 {dimension_numbers = #tpu.dot_dimension_numbers<[1], [0], [0], [1], [0, 0, 1, 1], [], []>} : vector<16x16xbf16>, vector<16x16xbf16>, vector<16x16xf32> -> vector<16x16xf32>
    %80 = arith.addf %70, %79 : vector<16x16xf32>
    %81 = arith.truncf %59 : vector<16x16xf32> to vector<16x16xbf16>
    %c2_41 = arith.constant 2 : index
    %c0_42 = arith.constant 0 : index
    %c0_43 = arith.constant 0 : index
    %82 = vector.load %arg5[%c2_41, %c0_42, %c0_43] : memref<3x16x16xbf16, #tpu.memory_space<vmem>>, vector<1x16x16xbf16>
    %83 = vector.shape_cast %82 : vector<1x16x16xbf16> to vector<16x16xbf16>
    %cst_44 = arith.constant dense<0.000000e+00> : vector<16x16xf32>
    %84 = tpu.matmul %81, %83, %cst_44 {dimension_numbers = #tpu.dot_dimension_numbers<[1], [0], [0], [1], [0, 0, 1, 1], [], []>} : vector<16x16xbf16>, vector<16x16xbf16>, vector<16x16xf32> -> vector<16x16xf32>
    %85 = arith.addf %80, %84 : vector<16x16xf32>
    %86 = vector.broadcast %8 : vector<1x16xf32> to vector<16x16xf32>
    %87 = arith.addf %85, %86 : vector<16x16xf32>
    %cst_45 = arith.constant dense<0.000000e+00> : vector<16xf32>
    %88 = vector.multi_reduction <add>, %87, %cst_45 [1] : vector<16x16xf32> to vector<16xf32>
    %89 = vector.shape_cast %88 : vector<16xf32> to vector<16x1xf32>
    %cst_46 = arith.constant 1.600000e+01 : f32
    %90 = vector.broadcast %cst_46 : f32 to vector<16x1xf32>
    %91 = arith.divf %89, %90 : vector<16x1xf32>
    %92 = vector.broadcast %91 : vector<16x1xf32> to vector<16x16xf32>
    %93 = arith.subf %87, %92 : vector<16x16xf32>
    %94 = arith.mulf %93, %93 : vector<16x16xf32>
    %cst_47 = arith.constant dense<0.000000e+00> : vector<16xf32>
    %95 = vector.multi_reduction <add>, %94, %cst_47 [1] : vector<16x16xf32> to vector<16xf32>
    %96 = vector.shape_cast %95 : vector<16xf32> to vector<16x1xf32>
    %cst_48 = arith.constant 1.600000e+01 : f32
    %97 = vector.broadcast %cst_48 : f32 to vector<16x1xf32>
    %98 = arith.divf %96, %97 : vector<16x1xf32>
    %cst_49 = arith.constant 9.99999993E-9 : f32
    %99 = vector.broadcast %cst_49 : f32 to vector<16x1xf32>
    %100 = arith.addf %98, %99 : vector<16x1xf32>
    %101 = math.rsqrt %100 : vector<16x1xf32>
    %102 = vector.broadcast %101 : vector<16x1xf32> to vector<16x16xf32>
    %103 = arith.mulf %93, %102 : vector<16x16xf32>
    %104 = vector.broadcast %5 : vector<1x16xf32> to vector<16x16xf32>
    %105 = arith.mulf %103, %104 : vector<16x16xf32>
    %106 = vector.broadcast %6 : vector<1x16xf32> to vector<16x16xf32>
    %107 = arith.addf %105, %106 : vector<16x16xf32>
    %cst_50 = arith.constant 0.000000e+00 : f32
    %108 = vector.broadcast %cst_50 : f32 to vector<16x16xf32>
    %109 = arith.maximumf %107, %108 : vector<16x16xf32>
    %110 = arith.truncf %109 : vector<16x16xf32> to vector<16x16xbf16>
    %c0_51 = arith.constant 0 : index
    %c0_52 = arith.constant 0 : index
    %111 = vector.load %arg6[%c0_51, %c0_52] : memref<16x32xbf16, #tpu.memory_space<vmem>>, vector<16x32xbf16>
    %cst_53 = arith.constant dense<0.000000e+00> : vector<16x32xf32>
    %112 = tpu.matmul %110, %111, %cst_53 {dimension_numbers = #tpu.dot_dimension_numbers<[1], [0], [0], [1], [0, 0, 1, 1], [], []>} : vector<16x16xbf16>, vector<16x32xbf16>, vector<16x32xf32> -> vector<16x32xf32>
    %113 = vector.broadcast %2 : vector<1x32xf32> to vector<16x32xf32>
    %114 = arith.addf %112, %113 : vector<16x32xf32>
    %115 = arith.addf %114, %10 : vector<16x32xf32>
    %116 = vector.shape_cast %115 : vector<16x32xf32> to vector<2x8x32xf32>
    %c0_54 = arith.constant 0 : index
    %c0_55 = arith.constant 0 : index
    %c0_56 = arith.constant 0 : index
    %117 = vector.load %arg7[%c0_54, %c0_55, %c0_56] : memref<2x8x32xf32, #tpu.memory_space<vmem>>, vector<2x8x32xf32>
    tpu.vector_store %arg7[%c0_54, %c0_55, %c0_56], %116 {strides = array<i32>} : memref<2x8x32xf32, #tpu.memory_space<vmem>>, vector<2x8x32xf32>,
    return
  }
  func.func @transform_0(%arg0: i32) -> (i32, i32, i32) {
    %c0_i32 = arith.constant 0 : i32
    %c0_i32_0 = arith.constant 0 : i32
    %c0_i32_1 = arith.constant 0 : i32
    return %arg0, %c0_i32, %c0_i32_0 : i32, i32, i32
  }
  func.func @transform_1(%arg0: i32) -> (i32, i32) {
    %c0_i32 = arith.constant 0 : i32
    %c0_i32_0 = arith.constant 0 : i32
    %c0_i32_1 = arith.constant 0 : i32
    return %c0_i32, %c0_i32_0 : i32, i32
  }
  func.func @transform_2(%arg0: i32) -> (i32, i32) {
    %c0_i32 = arith.constant 0 : i32
    %c0_i32_0 = arith.constant 0 : i32
    %c0_i32_1 = arith.constant 0 : i32
    return %c0_i32, %c0_i32_0 : i32, i32
  }
  func.func @transform_3(%arg0: i32) -> (i32, i32) {
    %c0_i32 = arith.constant 0 : i32
    %c0_i32_0 = arith.constant 0 : i32
    %c0_i32_1 = arith.constant 0 : i32
    return %c0_i32, %c0_i32_0 : i32, i32
  }
  func.func @transform_4(%arg0: i32) -> (i32, i32, i32) {
    %c0_i32 = arith.constant 0 : i32
    %c0_i32_0 = arith.constant 0 : i32
    %c0_i32_1 = arith.constant 0 : i32
    %c0_i32_2 = arith.constant 0 : i32
    return %c0_i32, %c0_i32_0, %c0_i32_1 : i32, i32, i32
  }
  func.func @transform_5(%arg0: i32) -> (i32, i32) {
    %c0_i32 = arith.constant 0 : i32
    %c0_i32_0 = arith.constant 0 : i32
    %c0_i32_1 = arith.constant 0 : i32
    return %c0_i32, %c0_i32_0 : i32, i32
  }
  func.func @transform_6(%arg0: i32) -> (i32, i32, i32) {
    %c0_i32 = arith.constant 0 : i32
    %c0_i32_0 = arith.constant 0 : i32
    %c0_i32_1 = arith.constant 0 : i32
    return %arg0, %c0_i32, %c0_i32_0 : i32, i32, i32
  }
}

</mosaic_0001>

<llo_original>
// kernel: tpu_custom_call.1
$region0: #{tpu_custom_call.1}
  #allocation0 [shape = 'u32[]', space=smem, size = 0x4, offset = 0x4, fixed_abs, tag = 'smem constant byte address 0x4 - core index']
  #allocation1 [shape = 'u32[144,128]{1,0:T(1,128)}', space=vmem, size = 0x12000, scoped, tag = 'internal scratch']
  %s0 = inlined_call_operand.hbm [shape: f32[2,8,32], index: 0, kind: input, shape index: {}]
  %s1 = inlined_call_operand.hbm [shape: f32[3,32], index: 1, kind: input, shape index: {}]
  %s2 = inlined_call_operand.hbm [shape: f32[6,16], index: 2, kind: input, shape index: {}]
  %s3 = inlined_call_operand.vmem [shape: bf16[32,16], index: 3, kind: input, shape index: {}]
  %s4 = inlined_call_operand.vmem [shape: bf16[3,16,16], index: 4, kind: input, shape index: {}]
  %s5 = inlined_call_operand.vmem [shape: bf16[16,32], index: 5, kind: input, shape index: {}]
  %s6 = inlined_call_operand.hbm [shape: f32[2,8,32], index: 6, kind: output, shape index: {}]
  %s7 = sld [smem:[#allocation0]]
  $region46: #{tpu_custom_call.1} parent=0
    _
  %s9 = ssub.s32 1, %s7
  %s10 = scalar_select 0, %s9, %s7
  $region1: #{tpu_custom_call.1} parent=0
    #allocation2 [shape = 'u8[8192]{0}', space=vmem, size = 0x2000, scoped, tag = 'input window, operand 0, single buffered']
    #allocation3 [shape = 's32[1]{0}', space=sflag, size = 0x4, scoped, tag = 'scoped memory for tpu_custom_call.1']
    #allocation4 [shape = 's32[1]{0}', space=sflag, size = 0x4, scoped, tag = 'scoped memory for tpu_custom_call.1']
    #allocation5 [shape = 'u8[2048]{0}', space=vmem, size = 0x800, scoped, tag = 'input window, operand 1, single buffered']
    #allocation6 [shape = 's32[1]{0}', space=sflag, size = 0x4, scoped, tag = 'scoped memory for tpu_custom_call.1']
    #allocation7 [shape = 'u8[4096]{0}', space=vmem, size = 0x1000, scoped, tag = 'input window, operand 2, single buffered']
    #allocation8 [shape = 'u8[8192]{0}', space=vmem, size = 0x2000, scoped, tag = 'output window, operand 0, single buffered']
    %11 = vsyncpa [#allocation3], 0
    %12 = vsyncpa [#allocation6], 0
    %13 = vsyncpa [#allocation4], 0
    // Predicated region
    $region2: #{tpu_custom_call.1} parent=1 // pred_check
      _
    $region3: #{tpu_custom_call.1} parent=1 // pred_check_branch
      %15 = sbr.rel (0) target = $region5
    $region4: #{tpu_custom_call.1} parent=1 // pred_region
      %s17 = ssub.s32 256, 256
      %18 = vsyncadd [#allocation3], %s17
      %s19 = sshll.u32 [#allocation2], 4
      %s20 = int_to_ptr.vmem [resolvable:$true] %s19
      %25 = dma.hbm_to_vmem [thread:$0]  %s0, 256, %s20, [#allocation3], 128, 128, 8
    $region5: #{tpu_custom_call.1} parent=1 // pred_fallthru
      _
    // Predicated region
    $region6: #{tpu_custom_call.1} parent=1 // pred_check
      _
    $region7: #{tpu_custom_call.1} parent=1 // pred_check_branch
      %27 = sbr.rel (0) target = $region9
    $region8: #{tpu_custom_call.1} parent=1 // pred_region
      %s29 = ssub.s32 64, 64
      %30 = vsyncadd [#allocation6], %s29
      %s32 = sshll.u32 [#allocation5], 4
      %s33 = int_to_ptr.vmem [resolvable:$true] %s32
      %35 = dma.hbm_to_vmem [thread:$0]  %s1, 64, %s33, [#allocation6]
    $region9: #{tpu_custom_call.1} parent=1 // pred_fallthru
      _
    // Predicated region
    $region10: #{tpu_custom_call.1} parent=1 // pred_check
      _
    $region11: #{tpu_custom_call.1} parent=1 // pred_check_branch
      %37 = sbr.rel (0) target = $region13
    $region12: #{tpu_custom_call.1} parent=1 // pred_region
      %s39 = ssub.s32 128, 128
      %40 = vsyncadd [#allocation6], %s39
      %s42 = sshll.u32 [#allocation7], 4
      %s43 = int_to_ptr.vmem [resolvable:$true] %s42
      %45 = dma.hbm_to_vmem [thread:$0]  %s2, 128, %s43, [#allocation6]
    $region13: #{tpu_custom_call.1} parent=1 // pred_fallthru
      _
    // Predicated region
    $region14: #{tpu_custom_call.1} parent=1 // pred_check
      _
    $region15: #{tpu_custom_call.1} parent=1 // pred_check_branch
      %47 = sbr.rel (0) target = $region17
    $region16: #{tpu_custom_call.1} parent=1 // pred_region
      _
    $region17: #{tpu_custom_call.1} parent=1 // pred_fallthru
      _
    // Predicated region
    $region18: #{tpu_custom_call.1} parent=1 // pred_check
      _
    $region19: #{tpu_custom_call.1} parent=1 // pred_check_branch
      %49 = sbr.rel (0) target = $region21
    $region20: #{tpu_custom_call.1} parent=1 // pred_region
      _
    $region21: #{tpu_custom_call.1} parent=1 // pred_fallthru
      _
    // Predicated region
    $region22: #{tpu_custom_call.1} parent=1 // pred_check
      _
    $region23: #{tpu_custom_call.1} parent=1 // pred_check_branch
      %51 = sbr.rel (0) target = $region25
    $region24: #{tpu_custom_call.1} parent=1 // pred_region
      _
    $region25: #{tpu_custom_call.1} parent=1 // pred_fallthru
      _
    // Predicated region
    $region26: #{tpu_custom_call.1} parent=1 // pred_check
      _
    $region27: #{tpu_custom_call.1} parent=1 // pred_check_branch
      %53 = sbr.rel (0) target = $region29
    $region28: #{tpu_custom_call.1} parent=1 // pred_region
      %54 = dma.done [#allocation3], 256
    $region29: #{tpu_custom_call.1} parent=1 // pred_fallthru
      _
    // Predicated region
    $region30: #{tpu_custom_call.1} parent=1 // pred_check
      _
    $region31: #{tpu_custom_call.1} parent=1 // pred_check_branch
      %56 = sbr.rel (0) target = $region33
    $region32: #{tpu_custom_call.1} parent=1 // pred_region
      %57 = dma.done [#allocation6], 64
    $region33: #{tpu_custom_call.1} parent=1 // pred_fallthru
      _
    // Predicated region
    $region34: #{tpu_custom_call.1} parent=1 // pred_check
      _
    $region35: #{tpu_custom_call.1} parent=1 // pred_check_branch
      %59 = sbr.rel (0) target = $region37
    $region36: #{tpu_custom_call.1} parent=1 // pred_region
      %60 = dma.done [#allocation6], 128
    $region37: #{tpu_custom_call.1} parent=1 // pred_fallthru
      _
    %v62 = vld [vmem:[#allocation5] sm:$0x1]
    %v63 = vld [vmem:[#allocation5 + $0x1] sm:$0x1]
    %v64 = vld [vmem:[#allocation5 + $0x2] sm:$0x1]
    %v65 = vld [vmem:[#allocation7] sm:$0x1]
    %v66 = vld [vmem:[#allocation7 + $0x1] sm:$0x1]
    %v67 = vld [vmem:[#allocation7 + $0x2] sm:$0x1]
    %v68 = vld [vmem:[#allocation7 + $0x3] sm:$0x1]
    %v69 = vld [vmem:[#allocation7 + $0x4] sm:$0x1]
    %v70 = vld [vmem:[#allocation7 + $0x5] sm:$0x1]
    %v71 = vld [vmem:[#allocation2] sm:$0xff]
    %v72 = vld [vmem:[#allocation2 + $0x8] sm:$0xff]
    %vm73 = vcmask 261120
    %v74 = vsel %vm73, %v71, 0.0
    %75 = vadd.xlane.f32.xlu0 %v74
    %v76 = vpop.xlane.xlu0 %75
    %v77 = vsel %vm73, %v72, 0.0
    %78 = vadd.xlane.f32.xlu0 %v77
    %v79 = vpop.xlane.xlu0 %78
    %v80 = vrcp.pop 32.0
    %v81 = vmul.f32 %v76, %v80
    %v82 = vmul.f32 %v79, %v80
    %v83 = vsub.f32 %v71, %v81
    %v84 = vsub.f32 %v72, %v82
    %v85 = vmul.f32 %v83, %v83
    %v86 = vmul.f32 %v84, %v84
    %v87 = vsel %vm73, %v85, 0.0
    %88 = vadd.xlane.f32.xlu0 %v87
    %v89 = vpop.xlane.xlu0 %88
    %v90 = vsel %vm73, %v86, 0.0
    %91 = vadd.xlane.f32.xlu0 %v90
    %v92 = vpop.xlane.xlu0 %91
    %v93 = vmul.f32 %v89, %v80
    %v94 = vmul.f32 %v92, %v80
    %v95 = vadd.f32 %v93, 1e-08
    %v96 = vadd.f32 %v94, 1e-08
    %v97 = vrsqrt.pop %v95
    %v98 = vrsqrt.pop %v96
    %v99 = vmul.f32 %v83, %v97
    %v100 = vmul.f32 %v84, %v98
    %v101 = vlaneseq
    %v102 = vshrl.u32 %v101, 7
    %v103 = vsub.s32 0, %v102
    %v104 = vrot.slane %v62, %v103
    %v105 = vmul.f32 %v99, %v104
    %v106 = vmul.f32 %v100, %v104
    %v107 = vlaneseq
    %v108 = vshrl.u32 %v107, 7
    %v109 = vsub.s32 0, %v108
    %v110 = vrot.slane %v63, %v109
    %v111 = vadd.f32 %v105, %v110
    %v112 = vadd.f32 %v106, %v110
    %v113 = vmax.f32 %v111, 0.0
    %v114 = vmax.f32 %v112, 0.0
    %v115 = vpack.c.bf16 %v114, %v113
    %v116 = vld [vmem:[%s3] sm:$0xf]
    %v117 = vld [vmem:[%s3 + $0x4] sm:$0xf]
    %v118 = vld [vmem:[%s3 + $0x8] sm:$0xf]
    %v119 = vld [vmem:[%s3 + $0xc] sm:$0xf]
    %v120 = vlaneseq
    %v121 = vshrl.u32 %v120, 7
    %v122 = vsub.s32 0, %v121
    %v123 = vrot.slane %v69, %v122
    %v128 = vunpack.c.l.b16 %v116
    %v129 = vunpack.c.l.b16 %v117
    %v130 = vunpack.c.l.b16 %v118
    %v131 = vunpack.c.l.b16 %v119
    %v132 = vpack.c.b16 %v129, %v128
    %v133 = vpack.c.b16 %v131, %v130
    %v137 = vsel %vm73, %v115, 0
    %139 = vmatprep.subr.bf16.mxu0 0
    %140 = vmatpush1.bf16.msra.mxu0 0
    %141 = vmatprep.subr.bf16.mxu0 0
    %142 = vmatpush1.bf16.msra.mxu0 0
    %143 = vmatprep.subr.bf16.mxu0 0
    %144 = vmatpush1.bf16.msra.mxu0 0
    %145 = vmatprep.subr.bf16.mxu0 0
    %146 = vmatpush1.bf16.msra.mxu0 0
    %147 = vmatprep.subr.bf16.mxu0 0
    %148 = vmatpush1.bf16.msra.mxu0 0
    %149 = vmatprep.subr.bf16.mxu0 0
    %150 = vmatpush1.bf16.msra.mxu0 0
    %151 = vmatprep.subr.bf16.mxu0 0
    %152 = vmatpush1.bf16.msra.mxu0 %v133
    %153 = vmatprep.subr.bf16.mxu0 0
    %154 = vmatpush1.bf16.msra.mxu0 %v132
    %155 = vmatprep.subr.bf16.mxu0 0
    %156 = vmatpush2.bf16.msra.mxu0 0
    %157 = vmatprep.subr.bf16.mxu0 0
    %158 = vmatpush2.bf16.msra.mxu0 0
    %159 = vmatprep.subr.bf16.mxu0 0
    %160 = vmatpush2.bf16.msra.mxu0 0
    %161 = vmatprep.subr.bf16.mxu0 0
    %162 = vmatpush2.bf16.msra.mxu0 0
    %163 = vmatprep.subr.bf16.mxu0 0
    %164 = vmatpush2.bf16.msra.mxu0 0
    %165 = vmatprep.subr.bf16.mxu0 0
    %166 = vmatpush2.bf16.msra.mxu0 0
    %167 = vmatprep.subr.bf16.mxu0 0
    %168 = vmatpush2.bf16.msra.mxu0 0
    %169 = vmatprep.subr.bf16.mxu0 0
    %170 = vmatpush2.bf16.msra.mxu0 0
    %171 = vmatprep.mubr.bf16.mxu0 0
    %172 = vmatmul.mubr.bf16.gmra.mxu0 %v137
    %v173 = vpop.f32.mrf.mxu0
    %v174 = vadd.f32 %v123, %v173
    %v175 = vpop.f32.mrf.mxu0
    %v176 = vpop.f32.mrf.mxu0
    %v177 = vadd.f32 %v123, %v176
    %v178 = vpop.f32.mrf.mxu0
    %179 = vdwg.mxu0
    %vm180 = vcmask 130048
    %v181 = vsel %vm180, %v174, 0.0
    %182 = vadd.xlane.f32.xlu0 %v181
    %v183 = vpop.xlane.xlu0 %182
    %v184 = vsel %vm180, %v177, 0.0
    %185 = vadd.xlane.f32.xlu0 %v184
    %v186 = vpop.xlane.xlu0 %185
    %v187 = vrcp.pop 16.0
    %v188 = vmul.f32 %v183, %v187
    %v189 = vmul.f32 %v186, %v187
    %v190 = vsub.f32 %v174, %v188
    %v191 = vsub.f32 %v177, %v189
    %v192 = vmul.f32 %v190, %v190
    %v193 = vmul.f32 %v191, %v191
    %v194 = vsel %vm180, %v192, 0.0
    %195 = vadd.xlane.f32.xlu0 %v194
    %v196 = vpop.xlane.xlu0 %195
    %v197 = vsel %vm180, %v193, 0.0
    %198 = vadd.xlane.f32.xlu0 %v197
    %v199 = vpop.xlane.xlu0 %198
    %v200 = vmul.f32 %v196, %v187
    %v201 = vmul.f32 %v199, %v187
    %v202 = vadd.f32 %v200, 1e-08
    %v203 = vadd.f32 %v201, 1e-08
    %v204 = vrsqrt.pop %v202
    %v205 = vrsqrt.pop %v203
    %v206 = vmul.f32 %v190, %v204
    %v207 = vmul.f32 %v191, %v205
    %v208 = vlaneseq
    %v209 = vshrl.u32 %v208, 7
    %v210 = vsub.s32 0, %v209
    %v211 = vrot.slane %v65, %v210
    %v212 = vmul.f32 %v206, %v211
    %v213 = vmul.f32 %v207, %v211
    %v214 = vlaneseq
    %v215 = vshrl.u32 %v214, 7
    %v216 = vsub.s32 0, %v215
    %v217 = vrot.slane %v66, %v216
    %v218 = vadd.f32 %v212, %v217
    %v219 = vadd.f32 %v213, %v217
    %v220 = vmax.f32 %v218, 0.0
    %v221 = vmax.f32 %v219, 0.0
    %v222 = vlaneseq
    %v223 = vshrl.u32 %v222, 7
    %v224 = vrot.slane %v220, 4
    %v225 = vrot.slane %v221, 4
    %vm226 = vcmp.lt.s32.totalorder %v223, 4
    %v227 = vsel %vm226, %v224, %v225
    %v228 = vsel %vm226, %v225, %v224
    %vm229 = vcmp.ge.s32.totalorder %v223, 4
    %v230 = vsel %vm229, %v228, 0.0
    %v231 = vsel %vm229, %v227, 0.0
    %v232 = vpack.c.bf16 %v231, %v230
    %v233 = vld [vmem:[%s4] sm:$0xf]
    %v234 = vld [vmem:[%s4 + $0x4] sm:$0xf]
    %v235 = vrot.slane %v220, 6
    %v236 = vrot.slane %v221, 6
    %vm237 = vcmp.lt.s32.totalorder %v223, 2
    %v238 = vsel %vm237, %v235, %v236
    %v239 = vsel %vm237, %v236, %v235
    %vm240 = vcmp.ge.s32.totalorder %v223, 2
    %v241 = vsel %vm240, %v239, 0.0
    %v242 = vsel %vm240, %v238, 0.0
    %v243 = vpack.c.bf16 %v242, %v241
    %s244 = scalar_lea.vmem %s4, 8
    %v245 = vld [vmem:[%s244] sm:$0xf]
    %v246 = vld [vmem:[%s244 + $0x4] sm:$0xf]
    %v249 = vunpack.c.l.b16 %v245
    %v250 = vunpack.c.l.b16 %v246
    %v251 = vpack.c.b16 %v250, %v249
    %v254 = vsel %vm180, %v243, 0
    %256 = vmatprep.subr.bf16.mxu0 0
    %257 = vmatpush1.bf16.msra.mxu0 0
    %258 = vmatprep.subr.bf16.mxu0 0
    %259 = vmatpush1.bf16.msra.mxu0 0
    %260 = vmatprep.subr.bf16.mxu0 0
    %261 = vmatpush1.bf16.msra.mxu0 0
    %262 = vmatprep.subr.bf16.mxu0 0
    %263 = vmatpush1.bf16.msra.mxu0 0
    %264 = vmatprep.subr.bf16.mxu0 0
    %265 = vmatpush1.bf16.msra.mxu0 0
    %266 = vmatprep.subr.bf16.mxu0 0
    %267 = vmatpush1.bf16.msra.mxu0 0
    %268 = vmatprep.subr.bf16.mxu0 0
    %269 = vmatpush1.bf16.msra.mxu0 0
    %270 = vmatprep.subr.bf16.mxu0 0
    %271 = vmatpush1.bf16.msra.mxu0 %v251
    %272 = vmatprep.subr.bf16.mxu0 0
    %273 = vmatpush2.bf16.msra.mxu0 0
    %274 = vmatprep.subr.bf16.mxu0 0
    %275 = vmatpush2.bf16.msra.mxu0 0
    %276 = vmatprep.subr.bf16.mxu0 0
    %277 = vmatpush2.bf16.msra.mxu0 0
    %278 = vmatprep.subr.bf16.mxu0 0
    %279 = vmatpush2.bf16.msra.mxu0 0
    %280 = vmatprep.subr.bf16.mxu0 0
    %281 = vmatpush2.bf16.msra.mxu0 0
    %282 = vmatprep.subr.bf16.mxu0 0
    %283 = vmatpush2.bf16.msra.mxu0 0
    %284 = vmatprep.subr.bf16.mxu0 0
    %285 = vmatpush2.bf16.msra.mxu0 0
    %286 = vmatprep.subr.bf16.mxu0 0
    %287 = vmatpush2.bf16.msra.mxu0 0
    %288 = vmatprep.mubr.bf16.mxu0 0
    %289 = vmatmul.mubr.bf16.gmra.mxu0 %v254
    %v290 = vpop.f32.mrf.mxu0
    %v291 = vadd.f32 0.0, %v290
    %v292 = vpop.f32.mrf.mxu0
    %v293 = vpop.f32.mrf.mxu0
    %v294 = vadd.f32 0.0, %v293
    %v295 = vpop.f32.mrf.mxu0
    %296 = vdwg.mxu0
    %v299 = vunpack.c.l.b16 %v233
    %v300 = vunpack.c.l.b16 %v234
    %v301 = vpack.c.b16 %v300, %v299
    %v304 = vsel %vm180, %v232, 0
    %306 = vmatprep.subr.bf16.mxu0 0
    %307 = vmatpush1.bf16.msra.mxu0 0
    %308 = vmatprep.subr.bf16.mxu0 0
    %309 = vmatpush1.bf16.msra.mxu0 0
    %310 = vmatprep.subr.bf16.mxu0 0
    %311 = vmatpush1.bf16.msra.mxu0 0
    %312 = vmatprep.subr.bf16.mxu0 0
    %313 = vmatpush1.bf16.msra.mxu0 0
    %314 = vmatprep.subr.bf16.mxu0 0
    %315 = vmatpush1.bf16.msra.mxu0 0
    %316 = vmatprep.subr.bf16.mxu0 0
    %317 = vmatpush1.bf16.msra.mxu0 0
    %318 = vmatprep.subr.bf16.mxu0 0
    %319 = vmatpush1.bf16.msra.mxu0 0
    %320 = vmatprep.subr.bf16.mxu0 0
    %321 = vmatpush1.bf16.msra.mxu0 %v301
    %322 = vmatprep.subr.bf16.mxu0 0
    %323 = vmatpush2.bf16.msra.mxu0 0
    %324 = vmatprep.subr.bf16.mxu0 0
    %325 = vmatpush2.bf16.msra.mxu0 0
    %326 = vmatprep.subr.bf16.mxu0 0
    %327 = vmatpush2.bf16.msra.mxu0 0
    %328 = vmatprep.subr.bf16.mxu0 0
    %329 = vmatpush2.bf16.msra.mxu0 0
    %330 = vmatprep.subr.bf16.mxu0 0
    %331 = vmatpush2.bf16.msra.mxu0 0
    %332 = vmatprep.subr.bf16.mxu0 0
    %333 = vmatpush2.bf16.msra.mxu0 0
    %334 = vmatprep.subr.bf16.mxu0 0
    %335 = vmatpush2.bf16.msra.mxu0 0
    %336 = vmatprep.subr.bf16.mxu0 0
    %337 = vmatpush2.bf16.msra.mxu0 0
    %338 = vmatprep.mubr.bf16.mxu0 0
    %339 = vmatmul.mubr.bf16.gmra.mxu0 %v304
    %v340 = vpop.f32.mrf.mxu0
    %v341 = vadd.f32 %v291, %v340
    %v342 = vpop.f32.mrf.mxu0
    %v343 = vpop.f32.mrf.mxu0
    %v344 = vadd.f32 %v294, %v343
    %v345 = vpop.f32.mrf.mxu0
    %346 = vdwg.mxu0
    %v347 = vpack.c.bf16 %v221, %v220
    %s348 = scalar_lea.vmem %s4, 16
    %v349 = vld [vmem:[%s348] sm:$0xf]
    %v350 = vld [vmem:[%s348 + $0x4] sm:$0xf]
    %v353 = vunpack.c.l.b16 %v349
    %v354 = vunpack.c.l.b16 %v350
    %v355 = vpack.c.b16 %v354, %v353
    %v358 = vsel %vm180, %v347, 0
    %360 = vmatprep.subr.bf16.mxu0 0
    %361 = vmatpush1.bf16.msra.mxu0 0
    %362 = vmatprep.subr.bf16.mxu0 0
    %363 = vmatpush1.bf16.msra.mxu0 0
    %364 = vmatprep.subr.bf16.mxu0 0
    %365 = vmatpush1.bf16.msra.mxu0 0
    %366 = vmatprep.subr.bf16.mxu0 0
    %367 = vmatpush1.bf16.msra.mxu0 0
    %368 = vmatprep.subr.bf16.mxu0 0
    %369 = vmatpush1.bf16.msra.mxu0 0
    %370 = vmatprep.subr.bf16.mxu0 0
    %371 = vmatpush1.bf16.msra.mxu0 0
    %372 = vmatprep.subr.bf16.mxu0 0
    %373 = vmatpush1.bf16.msra.mxu0 0
    %374 = vmatprep.subr.bf16.mxu0 0
    %375 = vmatpush1.bf16.msra.mxu0 %v355
    %376 = vmatprep.subr.bf16.mxu0 0
    %377 = vmatpush2.bf16.msra.mxu0 0
    %378 = vmatprep.subr.bf16.mxu0 0
    %379 = vmatpush2.bf16.msra.mxu0 0
    %380 = vmatprep.subr.bf16.mxu0 0
    %381 = vmatpush2.bf16.msra.mxu0 0
    %382 = vmatprep.subr.bf16.mxu0 0
    %383 = vmatpush2.bf16.msra.mxu0 0
    %384 = vmatprep.subr.bf16.mxu0 0
    %385 = vmatpush2.bf16.msra.mxu0 0
    %386 = vmatprep.subr.bf16.mxu0 0
    %387 = vmatpush2.bf16.msra.mxu0 0
    %388 = vmatprep.subr.bf16.mxu0 0
    %389 = vmatpush2.bf16.msra.mxu0 0
    %390 = vmatprep.subr.bf16.mxu0 0
    %391 = vmatpush2.bf16.msra.mxu0 0
    %392 = vmatprep.mubr.bf16.mxu0 0
    %393 = vmatmul.mubr.bf16.gmra.mxu0 %v358
    %v394 = vpop.f32.mrf.mxu0
    %v395 = vadd.f32 0.0, %v394
    %v396 = vpop.f32.mrf.mxu0
    %v397 = vpop.f32.mrf.mxu0
    %v398 = vadd.f32 0.0, %v397
    %v399 = vpop.f32.mrf.mxu0
    %400 = vdwg.mxu0
    %v401 = vadd.f32 %v341, %v395
    %v402 = vadd.f32 %v344, %v398
    %v403 = vlaneseq
    %v404 = vshrl.u32 %v403, 7
    %v405 = vsub.s32 0, %v404
    %v406 = vrot.slane %v70, %v405
    %v407 = vadd.f32 %v401, %v406
    %v408 = vadd.f32 %v402, %v406
    %v409 = vsel %vm180, %v407, 0.0
    %410 = vadd.xlane.f32.xlu0 %v409
    %v411 = vpop.xlane.xlu0 %410
    %v412 = vsel %vm180, %v408, 0.0
    %413 = vadd.xlane.f32.xlu0 %v412
    %v414 = vpop.xlane.xlu0 %413
    %v415 = vmul.f32 %v411, %v187
    %v416 = vmul.f32 %v414, %v187
    %v417 = vsub.f32 %v407, %v415
    %v418 = vsub.f32 %v408, %v416
    %v419 = vmul.f32 %v417, %v417
    %v420 = vmul.f32 %v418, %v418
    %v421 = vsel %vm180, %v419, 0.0
    %422 = vadd.xlane.f32.xlu0 %v421
    %v423 = vpop.xlane.xlu0 %422
    %v424 = vsel %vm180, %v420, 0.0
    %425 = vadd.xlane.f32.xlu0 %v424
    %v426 = vpop.xlane.xlu0 %425
    %v427 = vmul.f32 %v423, %v187
    %v428 = vmul.f32 %v426, %v187
    %v429 = vadd.f32 %v427, 1e-08
    %v430 = vadd.f32 %v428, 1e-08
    %v431 = vrsqrt.pop %v429
    %v432 = vrsqrt.pop %v430
    %v433 = vmul.f32 %v417, %v431
    %v434 = vmul.f32 %v418, %v432
    %v435 = vlaneseq
    %v436 = vshrl.u32 %v435, 7
    %v437 = vsub.s32 0, %v436
    %v438 = vrot.slane %v67, %v437
    %v439 = vmul.f32 %v433, %v438
    %v440 = vmul.f32 %v434, %v438
    %v441 = vlaneseq
    %v442 = vshrl.u32 %v441, 7
    %v443 = vsub.s32 0, %v442
    %v444 = vrot.slane %v68, %v443
    %v445 = vadd.f32 %v439, %v444
    %v446 = vadd.f32 %v440, %v444
    %v447 = vmax.f32 %v445, 0.0
    %v448 = vmax.f32 %v446, 0.0
    %v449 = vpack.c.bf16 %v448, %v447
    %v450 = vld [vmem:[%s5] sm:$0xf]
    %v451 = vld [vmem:[%s5 + $0x4] sm:$0xf]
    %v452 = vlaneseq
    %v453 = vshrl.u32 %v452, 7
    %v454 = vsub.s32 0, %v453
    %v455 = vrot.slane %v64, %v454
    %v458 = vunpack.c.l.b16 %v450
    %v459 = vunpack.c.l.b16 %v451
    %v460 = vpack.c.b16 %v459, %v458
    %v463 = vsel %vm180, %v449, 0
    %465 = vmatprep.subr.bf16.mxu0 0
    %466 = vmatpush1.bf16.msra.mxu0 0
    %467 = vmatprep.subr.bf16.mxu0 0
    %468 = vmatpush1.bf16.msra.mxu0 0
    %469 = vmatprep.subr.bf16.mxu0 0
    %470 = vmatpush1.bf16.msra.mxu0 0
    %471 = vmatprep.subr.bf16.mxu0 0
    %472 = vmatpush1.bf16.msra.mxu0 0
    %473 = vmatprep.subr.bf16.mxu0 0
    %474 = vmatpush1.bf16.msra.mxu0 0
    %475 = vmatprep.subr.bf16.mxu0 0
    %476 = vmatpush1.bf16.msra.mxu0 0
    %477 = vmatprep.subr.bf16.mxu0 0
    %478 = vmatpush1.bf16.msra.mxu0 0
    %479 = vmatprep.subr.bf16.mxu0 0
    %480 = vmatpush1.bf16.msra.mxu0 %v460
    %481 = vmatprep.subr.bf16.mxu0 0
    %482 = vmatpush2.bf16.msra.mxu0 0
    %483 = vmatprep.subr.bf16.mxu0 0
    %484 = vmatpush2.bf16.msra.mxu0 0
    %485 = vmatprep.subr.bf16.mxu0 0
    %486 = vmatpush2.bf16.msra.mxu0 0
    %487 = vmatprep.subr.bf16.mxu0 0
    %488 = vmatpush2.bf16.msra.mxu0 0
    %489 = vmatprep.subr.bf16.mxu0 0
    %490 = vmatpush2.bf16.msra.mxu0 0
    %491 = vmatprep.subr.bf16.mxu0 0
    %492 = vmatpush2.bf16.msra.mxu0 0
    %493 = vmatprep.subr.bf16.mxu0 0
    %494 = vmatpush2.bf16.msra.mxu0 0
    %495 = vmatprep.subr.bf16.mxu0 0
    %496 = vmatpush2.bf16.msra.mxu0 0
    %497 = vmatprep.mubr.bf16.mxu0 0
    %498 = vmatmul.mubr.bf16.gmra.mxu0 %v463
    %v499 = vpop.f32.mrf.mxu0
    %v500 = vadd.f32 %v455, %v499
    %v501 = vpop.f32.mrf.mxu0
    %v502 = vpop.f32.mrf.mxu0
    %v503 = vadd.f32 %v455, %v502
    %v504 = vpop.f32.mrf.mxu0
    %505 = vdwg.mxu0
    %v506 = vadd.f32 %v500, %v71
    %v507 = vadd.f32 %v503, %v72
    %508 = vst.msk [vmem:[#allocation8] sm:$0xff] %vm73, %v506
    %509 = vst.msk [vmem:[#allocation8 + $0x8] sm:$0xff] %vm73, %v507
    // Predicated region
    $region38: #{tpu_custom_call.1} parent=1 // pred_check
      _
    $region39: #{tpu_custom_call.1} parent=1 // pred_check_branch
      %511 = sbr.rel (0) target = $region41
    $region40: #{tpu_custom_call.1} parent=1 // pred_region
      %s513 = ssub.s32 256, 256
      %514 = vsyncadd [#allocation4], %s513
      %s515 = sshll.u32 [#allocation8], 4
      %s516 = int_to_ptr.vmem [resolvable:$true] %s515
      %521 = dma.vmem_to_hbm [thread:$0]  %s516, 256, %s6, [#allocation4], 128, 128, 8
    $region41: #{tpu_custom_call.1} parent=1 // pred_fallthru
      _
    // Predicated region
    $region42: #{tpu_custom_call.1} parent=1 // pred_check
      _
    $region43: #{tpu_custom_call.1} parent=1 // pred_check_branch
      %523 = sbr.rel (0) target = $region45
    $region44: #{tpu_custom_call.1} parent=1 // pred_region
      %524 = dma.done [#allocation4], 256
    $region45: #{tpu_custom_call.1} parent=1 // pred_fallthru
      _
    %525 = vsyncpa [#allocation3], 1
    %526 = vsyncpa [#allocation6], 1
    %527 = vsyncpa [#allocation4], 1

</llo_original>
